<compile_context>
chip_gen: v7x
topology: tpu7x:2x2x1
jax: 0.10.0
libtpu: 0.0.40
codegen_flags: <defaults>
</compile_context>

<pallas_src>
import jax
import jax.numpy as jnp
from jax import lax
from jax.experimental import pallas as pl
from jax.experimental.pallas import tpu as pltpu


def _round_up(x, m):
    return ((x + m - 1) // m) * m


def critic_kernel(s_ref, a_ref, w1s_ref, w1a_ref, b1_ref, w2_ref, b2_ref,
                  w3t_ref, b3_ref, q_ref):
    # Layer 1: fused split-matmul == Linear over torch.cat([s, a], 1).
    h1 = jnp.dot(s_ref[...], w1s_ref[...], preferred_element_type=jnp.float32)
    h1 = h1 + jnp.dot(a_ref[...], w1a_ref[...],
                      preferred_element_type=jnp.float32)
    h1 = jnp.maximum(h1 + b1_ref[...], 0.0)

    # Layer 2.
    h2 = jnp.dot(h1, w2_ref[...], preferred_element_type=jnp.float32)
    h2 = jnp.maximum(h2 + b2_ref[...], 0.0)

    # Layer 3, transposed so the store is lane-dense:
    #   (1, H) contract (TILE_B, H) over H  ->  (1, TILE_B)
    q_t = lax.dot_general(w3t_ref[...], h2,
                          dimension_numbers=(((1,), (1,)), ((), ())),
                          preferred_element_type=jnp.float32)
    q_ref[...] = (q_t + b3_ref[0, 0]).astype(q_ref.dtype)


def critic_forward(s, a, params, *, tile_b=1024):
    """Critic forward: s (B, state_dim), a (B, action_dim) -> q (B, 1)."""
    w1_s, w1_a, b1, w2, b2, w3_t, b3 = params
    B, state_dim = s.shape
    action_dim = a.shape[1]
    hidden = w2.shape[0]

    # Batch tile: multiple of 128 (lane-dense output rows), capped by tile_b.
    tile = min(tile_b, _round_up(B, 128))
    padded_b = _round_up(B, tile)
    if padded_b != B:
        s = jnp.pad(s, ((0, padded_b - B), (0, 0)))
        a = jnp.pad(a, ((0, padded_b - B), (0, 0)))
    num_tiles = padded_b // tile

    const = lambda i: (0, 0)  # weights/biases stay VMEM-resident across grid
    out = pl.pallas_call(
        critic_kernel,
        out_shape=jax.ShapeDtypeStruct((num_tiles, tile), jnp.float32),
        grid=(num_tiles,),
        in_specs=[
            pl.BlockSpec((tile, state_dim), lambda i: (i, 0)),
            pl.BlockSpec((tile, action_dim), lambda i: (i, 0)),
            pl.BlockSpec((state_dim, hidden), const),
            pl.BlockSpec((action_dim, hidden), const),
            pl.BlockSpec((1, hidden), const),
            pl.BlockSpec((hidden, hidden), const),
            pl.BlockSpec((1, hidden), const),
            pl.BlockSpec((1, hidden), const),                    # w3^T
            pl.BlockSpec(memory_space=pltpu.MemorySpace.SMEM),   # b3 scalar
        ],
        out_specs=pl.BlockSpec((1, tile), lambda i: (i, 0)),
        compiler_params=pltpu.CompilerParams(
            dimension_semantics=("parallel",)),
    )(s, a, w1_s, w1_a, b1, w2, b2, w3_t, b3)

    # (num_tiles, tile) is row-major batch order; drop padding, restore (B, 1).
    return out.reshape(padded_b, 1)[:B]


def init_critic_params(key, state_dim, action_dim, hidden_width):
    """Deterministic synthetic init (uniform, PyTorch-Linear-like fan_in scaling).

    Returns weights already split / transposed into the kernel layout:
      (w1_s, w1_a, b1, w2, b2, w3_t, b3)
    """
    in_dim = state_dim + action_dim
    keys = jax.random.split(key, 6)

    def linear(kw, kb, fan_in, fan_out):
        bound = 1.0 / jnp.sqrt(jnp.float32(fan_in))
        w = jax.random.uniform(kw, (fan_in, fan_out), jnp.float32, -bound, bound)
        b = jax.random.uniform(kb, (1, fan_out), jnp.float32, -bound, bound)
        return w, b

    w1, b1 = linear(keys[0], keys[1], in_dim, hidden_width)
    w2, b2 = linear(keys[2], keys[3], hidden_width, hidden_width)
    w3, b3 = linear(keys[4], keys[5], hidden_width, 1)

    w1_s, w1_a = w1[:state_dim], w1[state_dim:]
    w3_t = w3.T                 # (1, hidden)
    b3_s = b3.reshape(1, 1)     # scalar, lives in SMEM inside the kernel
    return (w1_s, w1_a, b1, w2, b2, w3_t, b3_s)


def _reference(s, a, params):
    """Plain-JAX reference matching the PyTorch Critic.forward."""
    w1_s, w1_a, b1, w2, b2, w3_t, b3 = params
    sa = jnp.concatenate([s, a], axis=1)
    w1 = jnp.concatenate([w1_s, w1_a], axis=0)
    h = jnp.maximum(sa @ w1 + b1, 0.0)
    h = jnp.maximum(h @ w2 + b2, 0.0)
    return h @ w3_t.T + b3.reshape(1, 1)


if __name__ == "__main__":
    # NOTE: for a literal B=2 inference call, plain XLA fusion would beat any
    # kernel-launch overhead; the Pallas path targets the batched path and is
    # exercised here at small shapes for correctness.
    state_dim, action_dim, hidden_width = 8, 4, 32

    key = jax.random.PRNGKey(0)
    k_s, k_a, k_p = jax.random.split(key, 3)
    params = init_critic_params(k_p, state_dim, action_dim, hidden_width)

    # Toy case (B=2 -> one 128-row tile after padding).
    s = jax.random.normal(k_s, (2, state_dim), jnp.float32)
    a = jax.random.normal(k_a, (2, action_dim), jnp.float32)
    q = critic_forward(s, a, params)
    jax.block_until_ready(q)
    assert q.shape == (2, 1)
    assert jnp.allclose(q, _reference(s, a, params), atol=1e-4, rtol=1e-4)

    # Multi-tile case exercising the batch grid, pipelining and padding
    # (B=300, tile_b=128 -> grid of 3 steps, last tile partially padded).
    k_s2, k_a2 = jax.random.split(k_s)
    s2 = jax.random.normal(k_s2, (300, state_dim), jnp.float32)
    a2 = jax.random.normal(k_a2, (300, action_dim), jnp.float32)
    q2 = critic_forward(s2, a2, params, tile_b=128)
    jax.block_until_ready(q2)
    assert q2.shape == (300, 1)
    assert jnp.allclose(q2, _reference(s2, a2, params), atol=1e-4, rtol=1e-4)

    print("KERNEL_OK")
</pallas_src>

<mosaic_0001>
module attributes {stable_mosaic.version = 11 : i64} {
  func.func @critic_kernel(%arg0: i32, %arg1: memref<128x8xf32, #tpu.memory_space<vmem>>, %arg2: memref<128x4xf32, #tpu.memory_space<vmem>>, %arg3: memref<8x32xf32, #tpu.memory_space<vmem>>, %arg4: memref<4x32xf32, #tpu.memory_space<vmem>>, %arg5: memref<1x32xf32, #tpu.memory_space<vmem>>, %arg6: memref<32x32xf32, #tpu.memory_space<vmem>>, %arg7: memref<1x32xf32, #tpu.memory_space<vmem>>, %arg8: memref<1x32xf32, #tpu.memory_space<vmem>>, %arg9: memref<1x1xf32, #tpu.memory_space<smem>>, %arg10: memref<1x128xf32, #tpu.memory_space<vmem>>) attributes {dimension_semantics = [#tpu.dimension_semantics<parallel>], iteration_bounds = array<i64: 1>, scalar_prefetch = 0 : i64, scratch_operands = 0 : i64, tpu.core_type = #tpu.core_type<tc>, window_params = [{transform_indices = @transform_0, window_bounds = array<i64: 128, 8>}, {transform_indices = @transform_1, window_bounds = array<i64: 128, 4>}, {pipeline_mode = #tpu.pipeline_mode<synchronous>, transform_indices = @transform_2, window_bounds = array<i64: 8, 32>}, {pipeline_mode = #tpu.pipeline_mode<synchronous>, transform_indices = @transform_3, window_bounds = array<i64: 4, 32>}, {pipeline_mode = #tpu.pipeline_mode<synchronous>, transform_indices = @transform_4, window_bounds = array<i64: 1, 32>}, {pipeline_mode = #tpu.pipeline_mode<synchronous>, transform_indices = @transform_5, window_bounds = array<i64: 32, 32>}, {pipeline_mode = #tpu.pipeline_mode<synchronous>, transform_indices = @transform_6, window_bounds = array<i64: 1, 32>}, {pipeline_mode = #tpu.pipeline_mode<synchronous>, transform_indices = @transform_7, window_bounds = array<i64: 1, 32>}, {transform_indices = @transform_8, window_bounds = array<i64: 1, 1>}, {transform_indices = @transform_9, window_bounds = array<i64: 1, 128>}]} {
    %c0 = arith.constant 0 : index
    %c0_0 = arith.constant 0 : index
    %0 = vector.load %arg1[%c0, %c0_0] : memref<128x8xf32, #tpu.memory_space<vmem>>, vector<128x8xf32>
    %c0_1 = arith.constant 0 : index
    %c0_2 = arith.constant 0 : index
    %1 = vector.load %arg3[%c0_1, %c0_2] : memref<8x32xf32, #tpu.memory_space<vmem>>, vector<8x32xf32>
    %cst = arith.constant dense<0.000000e+00> : vector<128x32xf32>
    %2 = tpu.matmul %0, %1, %cst {dimension_numbers = #tpu.dot_dimension_numbers<[1], [0], [0], [1], [0, 0, 1, 1], [], []>} : vector<128x8xf32>, vector<8x32xf32>, vector<128x32xf32> -> vector<128x32xf32>
    %c0_3 = arith.constant 0 : index
    %c0_4 = arith.constant 0 : index
    %3 = vector.load %arg2[%c0_3, %c0_4] : memref<128x4xf32, #tpu.memory_space<vmem>>, vector<128x4xf32>
    %c0_5 = arith.constant 0 : index
    %c0_6 = arith.constant 0 : index
    %4 = vector.load %arg4[%c0_5, %c0_6] : memref<4x32xf32, #tpu.memory_space<vmem>>, vector<4x32xf32>
    %cst_7 = arith.constant dense<0.000000e+00> : vector<128x32xf32>
    %5 = tpu.matmul %3, %4, %cst_7 {dimension_numbers = #tpu.dot_dimension_numbers<[1], [0], [0], [1], [0, 0, 1, 1], [], []>} : vector<128x4xf32>, vector<4x32xf32>, vector<128x32xf32> -> vector<128x32xf32>
    %6 = arith.addf %2, %5 : vector<128x32xf32>
    %c0_8 = arith.constant 0 : index
    %c0_9 = arith.constant 0 : index
    %7 = vector.load %arg5[%c0_8, %c0_9] : memref<1x32xf32, #tpu.memory_space<vmem>>, vector<1x32xf32>
    %8 = vector.broadcast %7 : vector<1x32xf32> to vector<128x32xf32>
    %9 = arith.addf %6, %8 : vector<128x32xf32>
    %cst_10 = arith.constant 0.000000e+00 : f32
    %10 = vector.broadcast %cst_10 : f32 to vector<128x32xf32>
    %11 = arith.maximumf %9, %10 : vector<128x32xf32>
    %c0_11 = arith.constant 0 : index
    %c0_12 = arith.constant 0 : index
    %12 = vector.load %arg6[%c0_11, %c0_12] : memref<32x32xf32, #tpu.memory_space<vmem>>, vector<32x32xf32>
    %cst_13 = arith.constant dense<0.000000e+00> : vector<128x32xf32>
    %13 = tpu.matmul %11, %12, %cst_13 {dimension_numbers = #tpu.dot_dimension_numbers<[1], [0], [0], [1], [0, 0, 1, 1], [], []>} : vector<128x32xf32>, vector<32x32xf32>, vector<128x32xf32> -> vector<128x32xf32>
    %c0_14 = arith.constant 0 : index
    %c0_15 = arith.constant 0 : index
    %14 = vector.load %arg7[%c0_14, %c0_15] : memref<1x32xf32, #tpu.memory_space<vmem>>, vector<1x32xf32>
    %15 = vector.broadcast %14 : vector<1x32xf32> to vector<128x32xf32>
    %16 = arith.addf %13, %15 : vector<128x32xf32>
    %cst_16 = arith.constant 0.000000e+00 : f32
    %17 = vector.broadcast %cst_16 : f32 to vector<128x32xf32>
    %18 = arith.maximumf %16, %17 : vector<128x32xf32>
    %c0_17 = arith.constant 0 : index
    %c0_18 = arith.constant 0 : index
    %19 = vector.load %arg8[%c0_17, %c0_18] : memref<1x32xf32, #tpu.memory_space<vmem>>, vector<1x32xf32>
    %cst_19 = arith.constant dense<0.000000e+00> : vector<1x128xf32>
    %20 = tpu.matmul %19, %18, %cst_19 {dimension_numbers = #tpu.dot_dimension_numbers<[1], [1], [0], [0], [0, 0, 1, 0], [], []>} : vector<1x32xf32>, vector<128x32xf32>, vector<1x128xf32> -> vector<1x128xf32>
    %c0_20 = arith.constant 0 : index
    %c0_21 = arith.constant 0 : index
    %21 = memref.load %arg9[%c0_20, %c0_21] : memref<1x1xf32, #tpu.memory_space<smem>>
    %22 = vector.broadcast %21 : f32 to vector<1x128xf32>
    %23 = arith.addf %20, %22 : vector<1x128xf32>
    %c0_22 = arith.constant 0 : index
    %c0_23 = arith.constant 0 : index
    %24 = vector.load %arg10[%c0_22, %c0_23] : memref<1x128xf32, #tpu.memory_space<vmem>>, vector<1x128xf32>
    tpu.vector_store %arg10[%c0_22, %c0_23], %23 {strides = array<i32>} : memref<1x128xf32, #tpu.memory_space<vmem>>, vector<1x128xf32>,
    return
  }
  func.func @transform_0(%arg0: i32) -> (i32, i32) {
    %c0_i32 = arith.constant 0 : i32
    %c0_i32_0 = arith.constant 0 : i32
    return %arg0, %c0_i32 : i32, i32
  }
  func.func @transform_1(%arg0: i32) -> (i32, i32) {
    %c0_i32 = arith.constant 0 : i32
    %c0_i32_0 = arith.constant 0 : i32
    return %arg0, %c0_i32 : i32, i32
  }
  func.func @transform_2(%arg0: i32) -> (i32, i32) {
    %c0_i32 = arith.constant 0 : i32
    %c0_i32_0 = arith.constant 0 : i32
    %c0_i32_1 = arith.constant 0 : i32
    return %c0_i32, %c0_i32_0 : i32, i32
  }
  func.func @transform_3(%arg0: i32) -> (i32, i32) {
    %c0_i32 = arith.constant 0 : i32
    %c0_i32_0 = arith.constant 0 : i32
    %c0_i32_1 = arith.constant 0 : i32
    return %c0_i32, %c0_i32_0 : i32, i32
  }
  func.func @transform_4(%arg0: i32) -> (i32, i32) {
    %c0_i32 = arith.constant 0 : i32
    %c0_i32_0 = arith.constant 0 : i32
    %c0_i32_1 = arith.constant 0 : i32
    return %c0_i32, %c0_i32_0 : i32, i32
  }
  func.func @transform_5(%arg0: i32) -> (i32, i32) {
    %c0_i32 = arith.constant 0 : i32
    %c0_i32_0 = arith.constant 0 : i32
    %c0_i32_1 = arith.constant 0 : i32
    return %c0_i32, %c0_i32_0 : i32, i32
  }
  func.func @transform_6(%arg0: i32) -> (i32, i32) {
    %c0_i32 = arith.constant 0 : i32
    %c0_i32_0 = arith.constant 0 : i32
    %c0_i32_1 = arith.constant 0 : i32
    return %c0_i32, %c0_i32_0 : i32, i32
  }
  func.func @transform_7(%arg0: i32) -> (i32, i32) {
    %c0_i32 = arith.constant 0 : i32
    %c0_i32_0 = arith.constant 0 : i32
    %c0_i32_1 = arith.constant 0 : i32
    return %c0_i32, %c0_i32_0 : i32, i32
  }
  func.func @transform_8(%arg0: i32) -> (i32, i32) {
    %c0_i32 = arith.constant 0 : i32
    %c0_i32_0 = arith.constant 0 : i32
    %c0_i32_1 = arith.constant 0 : i32
    return %c0_i32, %c0_i32_0 : i32, i32
  }
  func.func @transform_9(%arg0: i32) -> (i32, i32) {
    %c0_i32 = arith.constant 0 : i32
    %c0_i32_0 = arith.constant 0 : i32
    return %arg0, %c0_i32 : i32, i32
  }
}

</mosaic_0001>

<llo_original>
// kernel: tpu_custom_call.1
$region0: #{tpu_custom_call.1}
  #allocation0 [shape = 'u32[]', space=smem, size = 0x4, offset = 0x4, fixed_abs, tag = 'smem constant byte address 0x4 - core index']
  #allocation1 [shape = 'u32[144,128]{1,0:T(1,128)}', space=vmem, size = 0x12000, scoped, tag = 'internal scratch']
  #allocation2 [shape = 'f32[1,1]{1,0:T(1,128)S(6)}', space=smem, size = 0x200, scoped, tag = 'scoped memory for tpu_custom_call.1']
  %s0 = inlined_call_operand.vmem [shape: f32[128,8], index: 0, kind: input, shape index: {}]
  %s1 = inlined_call_operand.vmem [shape: f32[128,4], index: 1, kind: input, shape index: {}]
  %s2 = inlined_call_operand.vmem [shape: f32[8,32], index: 2, kind: input, shape index: {}]
  %s3 = inlined_call_operand.vmem [shape: f32[4,32], index: 3, kind: input, shape index: {}]
  %s4 = inlined_call_operand.vmem [shape: f32[1,32], index: 4, kind: input, shape index: {}]
  %s5 = inlined_call_operand.vmem [shape: f32[32,32], index: 5, kind: input, shape index: {}]
  %s6 = inlined_call_operand.vmem [shape: f32[1,32], index: 6, kind: input, shape index: {}]
  %s7 = inlined_call_operand.vmem [shape: f32[1,32], index: 7, kind: input, shape index: {}]
  %s8 = inlined_call_operand.<no memory space> [shape: f32[1,1], index: 8, kind: input, shape index: {}]
  %s9 = inlined_call_operand.hbm [shape: f32[1,128], index: 9, kind: output, shape index: {}]
  %s10 = sld [smem:[#allocation0]]
  $region46: #{tpu_custom_call.1} parent=0
    _
  %s12 = ssub.s32 1, %s10
  %s13 = scalar_select 0, %s12, %s10
  %14 = sst [smem:[#allocation2]] %s8
  $region1: #{tpu_custom_call.1} parent=0
    #allocation3 [shape = 'u8[512]{0}', space=vmem, size = 0x400, scoped, tag = 'output window, operand 0, single buffered']
    #allocation4 [shape = 's32[1]{0}', space=sflag, size = 0x4, scoped, tag = 'scoped memory for tpu_custom_call.1']
    %15 = vsyncpa [#allocation4], 0
    // Predicated region
    $region2: #{tpu_custom_call.1} parent=1 // pred_check
      _
    $region3: #{tpu_custom_call.1} parent=1 // pred_check_branch
      %17 = sbr.rel (0) target = $region5
    $region4: #{tpu_custom_call.1} parent=1 // pred_region
      _
    $region5: #{tpu_custom_call.1} parent=1 // pred_fallthru
      _
    // Predicated region
    $region6: #{tpu_custom_call.1} parent=1 // pred_check
      _
    $region7: #{tpu_custom_call.1} parent=1 // pred_check_branch
      %19 = sbr.rel (0) target = $region9
    $region8: #{tpu_custom_call.1} parent=1 // pred_region
      _
    $region9: #{tpu_custom_call.1} parent=1 // pred_fallthru
      _
    // Predicated region
    $region10: #{tpu_custom_call.1} parent=1 // pred_check
      _
    $region11: #{tpu_custom_call.1} parent=1 // pred_check_branch
      %21 = sbr.rel (0) target = $region13
    $region12: #{tpu_custom_call.1} parent=1 // pred_region
      _
    $region13: #{tpu_custom_call.1} parent=1 // pred_fallthru
      _
    // Predicated region
    $region14: #{tpu_custom_call.1} parent=1 // pred_check
      _
    $region15: #{tpu_custom_call.1} parent=1 // pred_check_branch
      %23 = sbr.rel (0) target = $region17
    $region16: #{tpu_custom_call.1} parent=1 // pred_region
      _
    $region17: #{tpu_custom_call.1} parent=1 // pred_fallthru
      _
    // Predicated region
    $region18: #{tpu_custom_call.1} parent=1 // pred_check
      _
    $region19: #{tpu_custom_call.1} parent=1 // pred_check_branch
      %25 = sbr.rel (0) target = $region21
    $region20: #{tpu_custom_call.1} parent=1 // pred_region
      _
    $region21: #{tpu_custom_call.1} parent=1 // pred_fallthru
      _
    // Predicated region
    $region22: #{tpu_custom_call.1} parent=1 // pred_check
      _
    $region23: #{tpu_custom_call.1} parent=1 // pred_check_branch
      %27 = sbr.rel (0) target = $region25
    $region24: #{tpu_custom_call.1} parent=1 // pred_region
      _
    $region25: #{tpu_custom_call.1} parent=1 // pred_fallthru
      _
    // Predicated region
    $region26: #{tpu_custom_call.1} parent=1 // pred_check
      _
    $region27: #{tpu_custom_call.1} parent=1 // pred_check_branch
      %29 = sbr.rel (0) target = $region29
    $region28: #{tpu_custom_call.1} parent=1 // pred_region
      _
    $region29: #{tpu_custom_call.1} parent=1 // pred_fallthru
      _
    // Predicated region
    $region30: #{tpu_custom_call.1} parent=1 // pred_check
      _
    $region31: #{tpu_custom_call.1} parent=1 // pred_check_branch
      %31 = sbr.rel (0) target = $region33
    $region32: #{tpu_custom_call.1} parent=1 // pred_region
      _
    $region33: #{tpu_custom_call.1} parent=1 // pred_fallthru
      _
    // Predicated region
    $region34: #{tpu_custom_call.1} parent=1 // pred_check
      _
    $region35: #{tpu_custom_call.1} parent=1 // pred_check_branch
      %33 = sbr.rel (0) target = $region37
    $region36: #{tpu_custom_call.1} parent=1 // pred_region
      _
    $region37: #{tpu_custom_call.1} parent=1 // pred_fallthru
      _
    %v34 = vld [vmem:[%s0] sm:$0xff]
    %v35 = vld [vmem:[%s0 + $0x8] sm:$0xff]
    %v36 = vld [vmem:[%s0 + $0x10] sm:$0xff]
    %v37 = vld [vmem:[%s0 + $0x18] sm:$0xff]
    %v38 = vld [vmem:[%s0 + $0x20] sm:$0xff]
    %v39 = vld [vmem:[%s0 + $0x28] sm:$0xff]
    %v40 = vld [vmem:[%s0 + $0x30] sm:$0xff]
    %v41 = vld [vmem:[%s0 + $0x38] sm:$0xff]
    %v42 = vld [vmem:[%s0 + $0x40] sm:$0xff]
    %v43 = vld [vmem:[%s0 + $0x48] sm:$0xff]
    %v44 = vld [vmem:[%s0 + $0x50] sm:$0xff]
    %v45 = vld [vmem:[%s0 + $0x58] sm:$0xff]
    %v46 = vld [vmem:[%s0 + $0x60] sm:$0xff]
    %v47 = vld [vmem:[%s0 + $0x68] sm:$0xff]
    %v48 = vld [vmem:[%s0 + $0x70] sm:$0xff]
    %v49 = vld [vmem:[%s0 + $0x78] sm:$0xff]
    %v50 = vld [vmem:[%s2] sm:$0xff]
    %v51 = vld [vmem:[%s1] sm:$0xff]
    %v52 = vld [vmem:[%s1 + $0x8] sm:$0xff]
    %v53 = vld [vmem:[%s1 + $0x10] sm:$0xff]
    %v54 = vld [vmem:[%s1 + $0x18] sm:$0xff]
    %v55 = vld [vmem:[%s1 + $0x20] sm:$0xff]
    %v56 = vld [vmem:[%s1 + $0x28] sm:$0xff]
    %v57 = vld [vmem:[%s1 + $0x30] sm:$0xff]
    %v58 = vld [vmem:[%s1 + $0x38] sm:$0xff]
    %v59 = vld [vmem:[%s1 + $0x40] sm:$0xff]
    %v60 = vld [vmem:[%s1 + $0x48] sm:$0xff]
    %v61 = vld [vmem:[%s1 + $0x50] sm:$0xff]
    %v62 = vld [vmem:[%s1 + $0x58] sm:$0xff]
    %v63 = vld [vmem:[%s1 + $0x60] sm:$0xff]
    %v64 = vld [vmem:[%s1 + $0x68] sm:$0xff]
    %v65 = vld [vmem:[%s1 + $0x70] sm:$0xff]
    %v66 = vld [vmem:[%s1 + $0x78] sm:$0xff]
    %v67 = vld [vmem:[%s3] sm:$0xf]
    %vm68 = vcmask 31744
    %v70 = vsel %vm68, %v51, 0
    %v73 = vsel %vm68, %v52, 0
    %v76 = vsel %vm68, %v53, 0
    %v79 = vsel %vm68, %v54, 0
    %v82 = vsel %vm68, %v55, 0
    %v85 = vsel %vm68, %v56, 0
    %v88 = vsel %vm68, %v57, 0
    %v91 = vsel %vm68, %v58, 0
    %v94 = vsel %vm68, %v59, 0
    %v97 = vsel %vm68, %v60, 0
    %v100 = vsel %vm68, %v61, 0
    %v103 = vsel %vm68, %v62, 0
    %v106 = vsel %vm68, %v63, 0
    %v109 = vsel %vm68, %v64, 0
    %v112 = vsel %vm68, %v65, 0
    %v115 = vsel %vm68, %v66, 0
    %vm117 = vcmask 1043456
    %v119 = vsel %vm117, %v67, 0
    %121 = vmatprep.subr.mxu0 0.0
    %122 = vmatpush1.msra.mxu0 %v119
    %123 = vmatprep.subr.mxu0 0.0
    %124 = vmatpush1.msra.mxu0 0.0
    %125 = vmatprep.subr.mxu0 0.0
    %126 = vmatpush1.msra.mxu0 0.0
    %127 = vmatprep.subr.mxu0 0.0
    %128 = vmatpush1.msra.mxu0 0.0
    %129 = vmatprep.subr.mxu0 0.0
    %130 = vmatpush1.msra.mxu0 0.0
    %131 = vmatprep.subr.mxu0 0.0
    %132 = vmatpush1.msra.mxu0 0.0
    %133 = vmatprep.subr.mxu0 0.0
    %134 = vmatpush1.msra.mxu0 0.0
    %135 = vmatprep.subr.mxu0 0.0
    %136 = vmatpush1.msra.mxu0 0.0
    %137 = vmatprep.subr.mxu0 0.0
    %138 = vmatpush1.msra.mxu0 0.0
    %139 = vmatprep.subr.mxu0 0.0
    %140 = vmatpush1.msra.mxu0 0.0
    %141 = vmatprep.subr.mxu0 0.0
    %142 = vmatpush1.msra.mxu0 0.0
    %143 = vmatprep.subr.mxu0 0.0
    %144 = vmatpush1.msra.mxu0 0.0
    %145 = vmatprep.subr.mxu0 0.0
    %146 = vmatpush1.msra.mxu0 0.0
    %147 = vmatprep.subr.mxu0 0.0
    %148 = vmatpush1.msra.mxu0 0.0
    %149 = vmatprep.subr.mxu0 0.0
    %150 = vmatpush1.msra.mxu0 0.0
    %151 = vmatprep.subr.mxu0 0.0
    %152 = vmatpush1.msra.mxu0 0.0
    %153 = vmatprep.subr.mxu0 0.0
    %154 = vmatpush1.msra.mxu0 0.0
    %155 = vmatprep.subr.mxu0 0.0
    %156 = vmatpush1.msra.mxu0 0.0
    %157 = vmatprep.subr.mxu0 0.0
    %158 = vmatpush1.msra.mxu0 0.0
    %159 = vmatprep.subr.mxu0 0.0
    %160 = vmatpush1.msra.mxu0 0.0
    %161 = vmatprep.subr.mxu0 0.0
    %162 = vmatpush1.msra.mxu0 0.0
    %163 = vmatprep.subr.mxu0 0.0
    %164 = vmatpush1.msra.mxu0 0.0
    %165 = vmatprep.subr.mxu0 0.0
    %166 = vmatpush1.msra.mxu0 0.0
    %167 = vmatprep.subr.mxu0 0.0
    %168 = vmatpush1.msra.mxu0 0.0
    %169 = vmatprep.subr.mxu0 0.0
    %170 = vmatpush1.msra.mxu0 0.0
    %171 = vmatprep.subr.mxu0 0.0
    %172 = vmatpush1.msra.mxu0 0.0
    %173 = vmatprep.subr.mxu0 0.0
    %174 = vmatpush1.msra.mxu0 0.0
    %175 = vmatprep.subr.mxu0 0.0
    %176 = vmatpush1.msra.mxu0 0.0
    %177 = vmatprep.subr.mxu0 0.0
    %178 = vmatpush1.msra.mxu0 0.0
    %179 = vmatprep.subr.mxu0 0.0
    %180 = vmatpush1.msra.mxu0 0.0
    %181 = vmatprep.subr.mxu0 0.0
    %182 = vmatpush1.msra.mxu0 0.0
    %183 = vmatprep.subr.mxu0 0.0
    %184 = vmatpush1.msra.mxu0 0.0
    %185 = vmatprep.mubr.f32.mxu0 0.0
    %186 = vmatmul.mubr.f32.gmra.mrb[0].mxu0 %v70
    %v187 = vpop.f32.mrb[0].mxu0
    %v188 = vadd.f32 0.0, %v187
    %v189 = vpop.f32.mrb[0].mxu0
    %190 = vmatprep.mubr.f32.mxu0 0.0
    %191 = vmatmul.mubr.f32.gmra.mrb[0].mxu0 %v73
    %v192 = vpop.f32.mrb[0].mxu0
    %v193 = vadd.f32 0.0, %v192
    %v194 = vpop.f32.mrb[0].mxu0
    %195 = vmatprep.mubr.f32.mxu0 0.0
    %196 = vmatmul.mubr.f32.gmra.mrb[0].mxu0 %v76
    %v197 = vpop.f32.mrb[0].mxu0
    %v198 = vadd.f32 0.0, %v197
    %v199 = vpop.f32.mrb[0].mxu0
    %200 = vmatprep.mubr.f32.mxu0 0.0
    %201 = vmatmul.mubr.f32.gmra.mrb[0].mxu0 %v79
    %v202 = vpop.f32.mrb[0].mxu0
    %v203 = vadd.f32 0.0, %v202
    %v204 = vpop.f32.mrb[0].mxu0
    %205 = vmatprep.mubr.f32.mxu0 0.0
    %206 = vmatmul.mubr.f32.gmra.mrb[0].mxu0 %v82
    %v207 = vpop.f32.mrb[0].mxu0
    %v208 = vadd.f32 0.0, %v207
    %v209 = vpop.f32.mrb[0].mxu0
    %210 = vmatprep.mubr.f32.mxu0 0.0
    %211 = vmatmul.mubr.f32.gmra.mrb[0].mxu0 %v85
    %v212 = vpop.f32.mrb[0].mxu0
    %v213 = vadd.f32 0.0, %v212
    %v214 = vpop.f32.mrb[0].mxu0
    %215 = vmatprep.mubr.f32.mxu0 0.0
    %216 = vmatmul.mubr.f32.gmra.mrb[0].mxu0 %v88
    %v217 = vpop.f32.mrb[0].mxu0
    %v218 = vadd.f32 0.0, %v217
    %v219 = vpop.f32.mrb[0].mxu0
    %220 = vmatprep.mubr.f32.mxu0 0.0
    %221 = vmatmul.mubr.f32.gmra.mrb[0].mxu0 %v91
    %v222 = vpop.f32.mrb[0].mxu0
    %v223 = vadd.f32 0.0, %v222
    %v224 = vpop.f32.mrb[0].mxu0
    %225 = vmatprep.mubr.f32.mxu0 0.0
    %226 = vmatmul.mubr.f32.gmra.mrb[0].mxu0 %v94
    %v227 = vpop.f32.mrb[0].mxu0
    %v228 = vadd.f32 0.0, %v227
    %v229 = vpop.f32.mrb[0].mxu0
    %230 = vmatprep.mubr.f32.mxu0 0.0
    %231 = vmatmul.mubr.f32.gmra.mrb[0].mxu0 %v97
    %v232 = vpop.f32.mrb[0].mxu0
    %v233 = vadd.f32 0.0, %v232
    %v234 = vpop.f32.mrb[0].mxu0
    %235 = vmatprep.mubr.f32.mxu0 0.0
    %236 = vmatmul.mubr.f32.gmra.mrb[0].mxu0 %v100
    %v237 = vpop.f32.mrb[0].mxu0
    %v238 = vadd.f32 0.0, %v237
    %v239 = vpop.f32.mrb[0].mxu0
    %240 = vmatprep.mubr.f32.mxu0 0.0
    %241 = vmatmul.mubr.f32.gmra.mrb[0].mxu0 %v103
    %v242 = vpop.f32.mrb[0].mxu0
    %v243 = vadd.f32 0.0, %v242
    %v244 = vpop.f32.mrb[0].mxu0
    %245 = vmatprep.mubr.f32.mxu0 0.0
    %246 = vmatmul.mubr.f32.gmra.mrb[0].mxu0 %v106
    %v247 = vpop.f32.mrb[0].mxu0
    %v248 = vadd.f32 0.0, %v247
    %v249 = vpop.f32.mrb[0].mxu0
    %250 = vmatprep.mubr.f32.mxu0 0.0
    %251 = vmatmul.mubr.f32.gmra.mrb[0].mxu0 %v109
    %v252 = vpop.f32.mrb[0].mxu0
    %v253 = vadd.f32 0.0, %v252
    %v254 = vpop.f32.mrb[0].mxu0
    %255 = vmatprep.mubr.f32.mxu0 0.0
    %256 = vmatmul.mubr.f32.gmra.mrb[0].mxu0 %v112
    %v257 = vpop.f32.mrb[0].mxu0
    %v258 = vadd.f32 0.0, %v257
    %v259 = vpop.f32.mrb[0].mxu0
    %260 = vmatprep.mubr.f32.mxu0 0.0
    %261 = vmatmul.mubr.f32.gmra.mrb[0].mxu0 %v115
    %v262 = vpop.f32.mrb[0].mxu0
    %v263 = vadd.f32 0.0, %v262
    %v264 = vpop.f32.mrb[0].mxu0
    %265 = vdwg.mxu0
    %vm266 = vcmask 64512
    %v268 = vsel %vm266, %v34, 0
    %v271 = vsel %vm266, %v35, 0
    %v274 = vsel %vm266, %v36, 0
    %v277 = vsel %vm266, %v37, 0
    %v280 = vsel %vm266, %v38, 0
    %v283 = vsel %vm266, %v39, 0
    %v286 = vsel %vm266, %v40, 0
    %v289 = vsel %vm266, %v41, 0
    %v292 = vsel %vm266, %v42, 0
    %v295 = vsel %vm266, %v43, 0
    %v298 = vsel %vm266, %v44, 0
    %v301 = vsel %vm266, %v45, 0
    %v304 = vsel %vm266, %v46, 0
    %v307 = vsel %vm266, %v47, 0
    %v310 = vsel %vm266, %v48, 0
    %v313 = vsel %vm266, %v49, 0
    %315 = vmatprep.subr.mxu0 0.0
    %316 = vmatpush1.msra.mxu0 %v50
    %317 = vmatprep.subr.mxu0 0.0
    %318 = vmatpush1.msra.mxu0 0.0
    %319 = vmatprep.subr.mxu0 0.0
    %320 = vmatpush1.msra.mxu0 0.0
    %321 = vmatprep.subr.mxu0 0.0
    %322 = vmatpush1.msra.mxu0 0.0
    %323 = vmatprep.subr.mxu0 0.0
    %324 = vmatpush1.msra.mxu0 0.0
    %325 = vmatprep.subr.mxu0 0.0
    %326 = vmatpush1.msra.mxu0 0.0
    %327 = vmatprep.subr.mxu0 0.0
    %328 = vmatpush1.msra.mxu0 0.0
    %329 = vmatprep.subr.mxu0 0.0
    %330 = vmatpush1.msra.mxu0 0.0
    %331 = vmatprep.subr.mxu0 0.0
    %332 = vmatpush1.msra.mxu0 0.0
    %333 = vmatprep.subr.mxu0 0.0
    %334 = vmatpush1.msra.mxu0 0.0
    %335 = vmatprep.subr.mxu0 0.0
    %336 = vmatpush1.msra.mxu0 0.0
    %337 = vmatprep.subr.mxu0 0.0
    %338 = vmatpush1.msra.mxu0 0.0
    %339 = vmatprep.subr.mxu0 0.0
    %340 = vmatpush1.msra.mxu0 0.0
    %341 = vmatprep.subr.mxu0 0.0
    %342 = vmatpush1.msra.mxu0 0.0
    %343 = vmatprep.subr.mxu0 0.0
    %344 = vmatpush1.msra.mxu0 0.0
    %345 = vmatprep.subr.mxu0 0.0
    %346 = vmatpush1.msra.mxu0 0.0
    %347 = vmatprep.subr.mxu0 0.0
    %348 = vmatpush1.msra.mxu0 0.0
    %349 = vmatprep.subr.mxu0 0.0
    %350 = vmatpush1.msra.mxu0 0.0
    %351 = vmatprep.subr.mxu0 0.0
    %352 = vmatpush1.msra.mxu0 0.0
    %353 = vmatprep.subr.mxu0 0.0
    %354 = vmatpush1.msra.mxu0 0.0
    %355 = vmatprep.subr.mxu0 0.0
    %356 = vmatpush1.msra.mxu0 0.0
    %357 = vmatprep.subr.mxu0 0.0
    %358 = vmatpush1.msra.mxu0 0.0
    %359 = vmatprep.subr.mxu0 0.0
    %360 = vmatpush1.msra.mxu0 0.0
    %361 = vmatprep.subr.mxu0 0.0
    %362 = vmatpush1.msra.mxu0 0.0
    %363 = vmatprep.subr.mxu0 0.0
    %364 = vmatpush1.msra.mxu0 0.0
    %365 = vmatprep.subr.mxu0 0.0
    %366 = vmatpush1.msra.mxu0 0.0
    %367 = vmatprep.subr.mxu0 0.0
    %368 = vmatpush1.msra.mxu0 0.0
    %369 = vmatprep.subr.mxu0 0.0
    %370 = vmatpush1.msra.mxu0 0.0
    %371 = vmatprep.subr.mxu0 0.0
    %372 = vmatpush1.msra.mxu0 0.0
    %373 = vmatprep.subr.mxu0 0.0
    %374 = vmatpush1.msra.mxu0 0.0
    %375 = vmatprep.subr.mxu0 0.0
    %376 = vmatpush1.msra.mxu0 0.0
    %377 = vmatprep.subr.mxu0 0.0
    %378 = vmatpush1.msra.mxu0 0.0
    %379 = vmatprep.mubr.f32.mxu0 0.0
    %380 = vmatmul.mubr.f32.gmra.mrb[0].mxu0 %v268
    %v381 = vpop.f32.mrb[0].mxu0
    %v382 = vadd.f32 %v188, %v381
    %v383 = vpop.f32.mrb[0].mxu0
    %384 = vmatprep.mubr.f32.mxu0 0.0
    %385 = vmatmul.mubr.f32.gmra.mrb[0].mxu0 %v271
    %v386 = vpop.f32.mrb[0].mxu0
    %v387 = vadd.f32 %v193, %v386
    %v388 = vpop.f32.mrb[0].mxu0
    %389 = vmatprep.mubr.f32.mxu0 0.0
    %390 = vmatmul.mubr.f32.gmra.mrb[0].mxu0 %v274
    %v391 = vpop.f32.mrb[0].mxu0
    %v392 = vadd.f32 %v198, %v391
    %v393 = vpop.f32.mrb[0].mxu0
    %394 = vmatprep.mubr.f32.mxu0 0.0
    %395 = vmatmul.mubr.f32.gmra.mrb[0].mxu0 %v277
    %v396 = vpop.f32.mrb[0].mxu0
    %v397 = vadd.f32 %v203, %v396
    %v398 = vpop.f32.mrb[0].mxu0
    %399 = vmatprep.mubr.f32.mxu0 0.0
    %400 = vmatmul.mubr.f32.gmra.mrb[0].mxu0 %v280
    %v401 = vpop.f32.mrb[0].mxu0
    %v402 = vadd.f32 %v208, %v401
    %v403 = vpop.f32.mrb[0].mxu0
    %404 = vmatprep.mubr.f32.mxu0 0.0
    %405 = vmatmul.mubr.f32.gmra.mrb[0].mxu0 %v283
    %v406 = vpop.f32.mrb[0].mxu0
    %v407 = vadd.f32 %v213, %v406
    %v408 = vpop.f32.mrb[0].mxu0
    %409 = vmatprep.mubr.f32.mxu0 0.0
    %410 = vmatmul.mubr.f32.gmra.mrb[0].mxu0 %v286
    %v411 = vpop.f32.mrb[0].mxu0
    %v412 = vadd.f32 %v218, %v411
    %v413 = vpop.f32.mrb[0].mxu0
    %414 = vmatprep.mubr.f32.mxu0 0.0
    %415 = vmatmul.mubr.f32.gmra.mrb[0].mxu0 %v289
    %v416 = vpop.f32.mrb[0].mxu0
    %v417 = vadd.f32 %v223, %v416
    %v418 = vpop.f32.mrb[0].mxu0
    %419 = vmatprep.mubr.f32.mxu0 0.0
    %420 = vmatmul.mubr.f32.gmra.mrb[0].mxu0 %v292
    %v421 = vpop.f32.mrb[0].mxu0
    %v422 = vadd.f32 %v228, %v421
    %v423 = vpop.f32.mrb[0].mxu0
    %424 = vmatprep.mubr.f32.mxu0 0.0
    %425 = vmatmul.mubr.f32.gmra.mrb[0].mxu0 %v295
    %v426 = vpop.f32.mrb[0].mxu0
    %v427 = vadd.f32 %v233, %v426
    %v428 = vpop.f32.mrb[0].mxu0
    %429 = vmatprep.mubr.f32.mxu0 0.0
    %430 = vmatmul.mubr.f32.gmra.mrb[0].mxu0 %v298
    %v431 = vpop.f32.mrb[0].mxu0
    %v432 = vadd.f32 %v238, %v431
    %v433 = vpop.f32.mrb[0].mxu0
    %434 = vmatprep.mubr.f32.mxu0 0.0
    %435 = vmatmul.mubr.f32.gmra.mrb[0].mxu0 %v301
    %v436 = vpop.f32.mrb[0].mxu0
    %v437 = vadd.f32 %v243, %v436
    %v438 = vpop.f32.mrb[0].mxu0
    %439 = vmatprep.mubr.f32.mxu0 0.0
    %440 = vmatmul.mubr.f32.gmra.mrb[0].mxu0 %v304
    %v441 = vpop.f32.mrb[0].mxu0
    %v442 = vadd.f32 %v248, %v441
    %v443 = vpop.f32.mrb[0].mxu0
    %444 = vmatprep.mubr.f32.mxu0 0.0
    %445 = vmatmul.mubr.f32.gmra.mrb[0].mxu0 %v307
    %v446 = vpop.f32.mrb[0].mxu0
    %v447 = vadd.f32 %v253, %v446
    %v448 = vpop.f32.mrb[0].mxu0
    %449 = vmatprep.mubr.f32.mxu0 0.0
    %450 = vmatmul.mubr.f32.gmra.mrb[0].mxu0 %v310
    %v451 = vpop.f32.mrb[0].mxu0
    %v452 = vadd.f32 %v258, %v451
    %v453 = vpop.f32.mrb[0].mxu0
    %454 = vmatprep.mubr.f32.mxu0 0.0
    %455 = vmatmul.mubr.f32.gmra.mrb[0].mxu0 %v313
    %v456 = vpop.f32.mrb[0].mxu0
    %v457 = vadd.f32 %v263, %v456
    %v458 = vpop.f32.mrb[0].mxu0
    %459 = vdwg.mxu0
    %v460 = vld [vmem:[%s4] sm:$0x1]
    %v462 = vlaneseq
    %v463 = vshrl.u32 %v462, 7
    %v464 = vsub.s32 0, %v463
    %v465 = vrot.slane %v460, %v464
    %v467 = vadd.f32 %v382, %v465
    %v468 = vadd.f32 %v387, %v465
    %v469 = vadd.f32 %v392, %v465
    %v470 = vadd.f32 %v397, %v465
    %v471 = vadd.f32 %v402, %v465
    %v472 = vadd.f32 %v407, %v465
    %v473 = vadd.f32 %v412, %v465
    %v474 = vadd.f32 %v417, %v465
    %v475 = vadd.f32 %v422, %v465
    %v476 = vadd.f32 %v427, %v465
    %v477 = vadd.f32 %v432, %v465
    %v478 = vadd.f32 %v437, %v465
    %v479 = vadd.f32 %v442, %v465
    %v480 = vadd.f32 %v447, %v465
    %v481 = vadd.f32 %v452, %v465
    %v482 = vadd.f32 %v457, %v465
    %v483 = vmax.f32 %v467, 0.0
    %v484 = vmax.f32 %v468, 0.0
    %v485 = vmax.f32 %v469, 0.0
    %v486 = vmax.f32 %v470, 0.0
    %v487 = vmax.f32 %v471, 0.0
    %v488 = vmax.f32 %v472, 0.0
    %v489 = vmax.f32 %v473, 0.0
    %v490 = vmax.f32 %v474, 0.0
    %v491 = vmax.f32 %v475, 0.0
    %v492 = vmax.f32 %v476, 0.0
    %v493 = vmax.f32 %v477, 0.0
    %v494 = vmax.f32 %v478, 0.0
    %v495 = vmax.f32 %v479, 0.0
    %v496 = vmax.f32 %v480, 0.0
    %v497 = vmax.f32 %v481, 0.0
    %v498 = vmax.f32 %v482, 0.0
    %v499 = vld [vmem:[%s5] sm:$0xff]
    %v500 = vld [vmem:[%s5 + $0x8] sm:$0xff]
    %v501 = vld [vmem:[%s5 + $0x10] sm:$0xff]
    %v502 = vld [vmem:[%s5 + $0x18] sm:$0xff]
    %v503 = vld [vmem:[%s6] sm:$0x1]
    %v505 = vlaneseq
    %v506 = vshrl.u32 %v505, 7
    %v507 = vsub.s32 0, %v506
    %v508 = vrot.slane %v503, %v507
    %vm510 = vcmask 261120
    %v512 = vsel %vm510, %v483, 0
    %v515 = vsel %vm510, %v484, 0
    %v518 = vsel %vm510, %v485, 0
    %v521 = vsel %vm510, %v486, 0
    %v524 = vsel %vm510, %v487, 0
    %v527 = vsel %vm510, %v488, 0
    %v530 = vsel %vm510, %v489, 0
    %v533 = vsel %vm510, %v490, 0
    %v536 = vsel %vm510, %v491, 0
    %v539 = vsel %vm510, %v492, 0
    %v542 = vsel %vm510, %v493, 0
    %v545 = vsel %vm510, %v494, 0
    %v548 = vsel %vm510, %v495, 0
    %v551 = vsel %vm510, %v496, 0
    %v554 = vsel %vm510, %v497, 0
    %v557 = vsel %vm510, %v498, 0
    %559 = vmatprep.subr.mxu0 0.0
    %560 = vmatpush1.msra.mxu0 %v499
    %561 = vmatprep.subr.mxu0 0.0
    %562 = vmatpush1.msra.mxu0 %v500
    %563 = vmatprep.subr.mxu0 0.0
    %564 = vmatpush1.msra.mxu0 %v501
    %565 = vmatprep.subr.mxu0 0.0
    %566 = vmatpush1.msra.mxu0 %v502
    %567 = vmatprep.subr.mxu0 0.0
    %568 = vmatpush1.msra.mxu0 0.0
    %569 = vmatprep.subr.mxu0 0.0
    %570 = vmatpush1.msra.mxu0 0.0
    %571 = vmatprep.subr.mxu0 0.0
    %572 = vmatpush1.msra.mxu0 0.0
    %573 = vmatprep.subr.mxu0 0.0
    %574 = vmatpush1.msra.mxu0 0.0
    %575 = vmatprep.subr.mxu0 0.0
    %576 = vmatpush1.msra.mxu0 0.0
    %577 = vmatprep.subr.mxu0 0.0
    %578 = vmatpush1.msra.mxu0 0.0
    %579 = vmatprep.subr.mxu0 0.0
    %580 = vmatpush1.msra.mxu0 0.0
    %581 = vmatprep.subr.mxu0 0.0
    %582 = vmatpush1.msra.mxu0 0.0
    %583 = vmatprep.subr.mxu0 0.0
    %584 = vmatpush1.msra.mxu0 0.0
    %585 = vmatprep.subr.mxu0 0.0
    %586 = vmatpush1.msra.mxu0 0.0
    %587 = vmatprep.subr.mxu0 0.0
    %588 = vmatpush1.msra.mxu0 0.0
    %589 = vmatprep.subr.mxu0 0.0
    %590 = vmatpush1.msra.mxu0 0.0
    %591 = vmatprep.subr.mxu0 0.0
    %592 = vmatpush1.msra.mxu0 0.0
    %593 = vmatprep.subr.mxu0 0.0
    %594 = vmatpush1.msra.mxu0 0.0
    %595 = vmatprep.subr.mxu0 0.0
    %596 = vmatpush1.msra.mxu0 0.0
    %597 = vmatprep.subr.mxu0 0.0
    %598 = vmatpush1.msra.mxu0 0.0
    %599 = vmatprep.subr.mxu0 0.0
    %600 = vmatpush1.msra.mxu0 0.0
    %601 = vmatprep.subr.mxu0 0.0
    %602 = vmatpush1.msra.mxu0 0.0
    %603 = vmatprep.subr.mxu0 0.0
    %604 = vmatpush1.msra.mxu0 0.0
    %605 = vmatprep.subr.mxu0 0.0
    %606 = vmatpush1.msra.mxu0 0.0
    %607 = vmatprep.subr.mxu0 0.0
    %608 = vmatpush1.msra.mxu0 0.0
    %609 = vmatprep.subr.mxu0 0.0
    %610 = vmatpush1.msra.mxu0 0.0
    %611 = vmatprep.subr.mxu0 0.0
    %612 = vmatpush1.msra.mxu0 0.0
    %613 = vmatprep.subr.mxu0 0.0
    %614 = vmatpush1.msra.mxu0 0.0
    %615 = vmatprep.subr.mxu0 0.0
    %616 = vmatpush1.msra.mxu0 0.0
    %617 = vmatprep.subr.mxu0 0.0
    %618 = vmatpush1.msra.mxu0 0.0
    %619 = vmatprep.subr.mxu0 0.0
    %620 = vmatpush1.msra.mxu0 0.0
    %621 = vmatprep.subr.mxu0 0.0
    %622 = vmatpush1.msra.mxu0 0.0
    %623 = vmatprep.mubr.f32.mxu0 0.0
    %624 = vmatmul.mubr.f32.gmra.mrb[0].mxu0 %v512
    %v625 = vpop.f32.mrb[0].mxu0
    %v626 = vadd.f32 %v508, %v625
    %v627 = vpop.f32.mrb[0].mxu0
    %628 = vmatprep.mubr.f32.mxu0 0.0
    %629 = vmatmul.mubr.f32.gmra.mrb[0].mxu0 %v515
    %v630 = vpop.f32.mrb[0].mxu0
    %v631 = vadd.f32 %v508, %v630
    %v632 = vpop.f32.mrb[0].mxu0
    %633 = vmatprep.mubr.f32.mxu0 0.0
    %634 = vmatmul.mubr.f32.gmra.mrb[0].mxu0 %v518
    %v635 = vpop.f32.mrb[0].mxu0
    %v636 = vadd.f32 %v508, %v635
    %v637 = vpop.f32.mrb[0].mxu0
    %638 = vmatprep.mubr.f32.mxu0 0.0
    %639 = vmatmul.mubr.f32.gmra.mrb[0].mxu0 %v521
    %v640 = vpop.f32.mrb[0].mxu0
    %v641 = vadd.f32 %v508, %v640
    %v642 = vpop.f32.mrb[0].mxu0
    %643 = vmatprep.mubr.f32.mxu0 0.0
    %644 = vmatmul.mubr.f32.gmra.mrb[0].mxu0 %v524
    %v645 = vpop.f32.mrb[0].mxu0
    %v646 = vadd.f32 %v508, %v645
    %v647 = vpop.f32.mrb[0].mxu0
    %648 = vmatprep.mubr.f32.mxu0 0.0
    %649 = vmatmul.mubr.f32.gmra.mrb[0].mxu0 %v527
    %v650 = vpop.f32.mrb[0].mxu0
    %v651 = vadd.f32 %v508, %v650
    %v652 = vpop.f32.mrb[0].mxu0
    %653 = vmatprep.mubr.f32.mxu0 0.0
    %654 = vmatmul.mubr.f32.gmra.mrb[0].mxu0 %v530
    %v655 = vpop.f32.mrb[0].mxu0
    %v656 = vadd.f32 %v508, %v655
    %v657 = vpop.f32.mrb[0].mxu0
    %658 = vmatprep.mubr.f32.mxu0 0.0
    %659 = vmatmul.mubr.f32.gmra.mrb[0].mxu0 %v533
    %v660 = vpop.f32.mrb[0].mxu0
    %v661 = vadd.f32 %v508, %v660
    %v662 = vpop.f32.mrb[0].mxu0
    %663 = vmatprep.mubr.f32.mxu0 0.0
    %664 = vmatmul.mubr.f32.gmra.mrb[0].mxu0 %v536
    %v665 = vpop.f32.mrb[0].mxu0
    %v666 = vadd.f32 %v508, %v665
    %v667 = vpop.f32.mrb[0].mxu0
    %668 = vmatprep.mubr.f32.mxu0 0.0
    %669 = vmatmul.mubr.f32.gmra.mrb[0].mxu0 %v539
    %v670 = vpop.f32.mrb[0].mxu0
    %v671 = vadd.f32 %v508, %v670
    %v672 = vpop.f32.mrb[0].mxu0
    %673 = vmatprep.mubr.f32.mxu0 0.0
    %674 = vmatmul.mubr.f32.gmra.mrb[0].mxu0 %v542
    %v675 = vpop.f32.mrb[0].mxu0
    %v676 = vadd.f32 %v508, %v675
    %v677 = vpop.f32.mrb[0].mxu0
    %678 = vmatprep.mubr.f32.mxu0 0.0
    %679 = vmatmul.mubr.f32.gmra.mrb[0].mxu0 %v545
    %v680 = vpop.f32.mrb[0].mxu0
    %v681 = vadd.f32 %v508, %v680
    %v682 = vpop.f32.mrb[0].mxu0
    %683 = vmatprep.mubr.f32.mxu0 0.0
    %684 = vmatmul.mubr.f32.gmra.mrb[0].mxu0 %v548
    %v685 = vpop.f32.mrb[0].mxu0
    %v686 = vadd.f32 %v508, %v685
    %v687 = vpop.f32.mrb[0].mxu0
    %688 = vmatprep.mubr.f32.mxu0 0.0
    %689 = vmatmul.mubr.f32.gmra.mrb[0].mxu0 %v551
    %v690 = vpop.f32.mrb[0].mxu0
    %v691 = vadd.f32 %v508, %v690
    %v692 = vpop.f32.mrb[0].mxu0
    %693 = vmatprep.mubr.f32.mxu0 0.0
    %694 = vmatmul.mubr.f32.gmra.mrb[0].mxu0 %v554
    %v695 = vpop.f32.mrb[0].mxu0
    %v696 = vadd.f32 %v508, %v695
    %v697 = vpop.f32.mrb[0].mxu0
    %698 = vmatprep.mubr.f32.mxu0 0.0
    %699 = vmatmul.mubr.f32.gmra.mrb[0].mxu0 %v557
    %v700 = vpop.f32.mrb[0].mxu0
    %v701 = vadd.f32 %v508, %v700
    %v702 = vpop.f32.mrb[0].mxu0
    %703 = vdwg.mxu0
    %v704 = vmax.f32 %v626, 0.0
    %v705 = vmax.f32 %v631, 0.0
    %v706 = vmax.f32 %v636, 0.0
    %v707 = vmax.f32 %v641, 0.0
    %v708 = vmax.f32 %v646, 0.0
    %v709 = vmax.f32 %v651, 0.0
    %v710 = vmax.f32 %v656, 0.0
    %v711 = vmax.f32 %v661, 0.0
    %v712 = vmax.f32 %v666, 0.0
    %v713 = vmax.f32 %v671, 0.0
    %v714 = vmax.f32 %v676, 0.0
    %v715 = vmax.f32 %v681, 0.0
    %v716 = vmax.f32 %v686, 0.0
    %v717 = vmax.f32 %v691, 0.0
    %v718 = vmax.f32 %v696, 0.0
    %v719 = vmax.f32 %v701, 0.0
    %v720 = vld [vmem:[%s7] sm:$0x1]
    %s721 = sld [smem:[#allocation2]]
    %v722 = vstv %s721
    %v724 = vsel %vm510, %v720, 0
    %v727 = vsel %vm510, %v704, 0
    %v730 = vsel %vm510, %v705, 0
    %v733 = vsel %vm510, %v706, 0
    %v736 = vsel %vm510, %v707, 0
    %v739 = vsel %vm510, %v708, 0
    %v742 = vsel %vm510, %v709, 0
    %v745 = vsel %vm510, %v710, 0
    %v748 = vsel %vm510, %v711, 0
    %v751 = vsel %vm510, %v712, 0
    %v754 = vsel %vm510, %v713, 0
    %v757 = vsel %vm510, %v714, 0
    %v760 = vsel %vm510, %v715, 0
    %v763 = vsel %vm510, %v716, 0
    %v766 = vsel %vm510, %v717, 0
    %v769 = vsel %vm510, %v718, 0
    %v772 = vsel %vm510, %v719, 0
    %774 = vmatprep.subr.mxu0 0.0
    %775 = vmatpush1.xpose.msra.mxu0 %v727
    %776 = vmatprep.subr.mxu0 0.0
    %777 = vmatpush1.xpose.msra.mxu0 %v730
    %778 = vmatprep.subr.mxu0 0.0
    %779 = vmatpush1.xpose.msra.mxu0 %v733
    %780 = vmatprep.subr.mxu0 0.0
    %781 = vmatpush1.xpose.msra.mxu0 %v736
    %782 = vmatprep.subr.mxu0 0.0
    %783 = vmatpush1.xpose.msra.mxu0 %v739
    %784 = vmatprep.subr.mxu0 0.0
    %785 = vmatpush1.xpose.msra.mxu0 %v742
    %786 = vmatprep.subr.mxu0 0.0
    %787 = vmatpush1.xpose.msra.mxu0 %v745
    %788 = vmatprep.subr.mxu0 0.0
    %789 = vmatpush1.xpose.msra.mxu0 %v748
    %790 = vmatprep.subr.mxu0 0.0
    %791 = vmatpush1.xpose.msra.mxu0 %v751
    %792 = vmatprep.subr.mxu0 0.0
    %793 = vmatpush1.xpose.msra.mxu0 %v754
    %794 = vmatprep.subr.mxu0 0.0
    %795 = vmatpush1.xpose.msra.mxu0 %v757
    %796 = vmatprep.subr.mxu0 0.0
    %797 = vmatpush1.xpose.msra.mxu0 %v760
    %798 = vmatprep.subr.mxu0 0.0
    %799 = vmatpush1.xpose.msra.mxu0 %v763
    %800 = vmatprep.subr.mxu0 0.0
    %801 = vmatpush1.xpose.msra.mxu0 %v766
    %802 = vmatprep.subr.mxu0 0.0
    %803 = vmatpush1.xpose.msra.mxu0 %v769
    %804 = vmatprep.subr.mxu0 0.0
    %805 = vmatpush1.xpose.msra.mxu0 %v772
    %806 = vmatprep.subr.mxu0 0.0
    %807 = vmatpush1.xpose.msra.mxu0 0.0
    %808 = vmatprep.subr.mxu0 0.0
    %809 = vmatpush1.xpose.msra.mxu0 0.0
    %810 = vmatprep.subr.mxu0 0.0
    %811 = vmatpush1.xpose.msra.mxu0 0.0
    %812 = vmatprep.subr.mxu0 0.0
    %813 = vmatpush1.xpose.msra.mxu0 0.0
    %814 = vmatprep.subr.mxu0 0.0
    %815 = vmatpush1.xpose.msra.mxu0 0.0
    %816 = vmatprep.subr.mxu0 0.0
    %817 = vmatpush1.xpose.msra.mxu0 0.0
    %818 = vmatprep.subr.mxu0 0.0
    %819 = vmatpush1.xpose.msra.mxu0 0.0
    %820 = vmatprep.subr.mxu0 0.0
    %821 = vmatpush1.xpose.msra.mxu0 0.0
    %822 = vmatprep.subr.mxu0 0.0
    %823 = vmatpush1.xpose.msra.mxu0 0.0
    %824 = vmatprep.subr.mxu0 0.0
    %825 = vmatpush1.xpose.msra.mxu0 0.0
    %826 = vmatprep.subr.mxu0 0.0
    %827 = vmatpush1.xpose.msra.mxu0 0.0
    %828 = vmatprep.subr.mxu0 0.0
    %829 = vmatpush1.xpose.msra.mxu0 0.0
    %830 = vmatprep.subr.mxu0 0.0
    %831 = vmatpush1.xpose.msra.mxu0 0.0
    %832 = vmatprep.subr.mxu0 0.0
    %833 = vmatpush1.xpose.msra.mxu0 0.0
    %834 = vmatprep.subr.mxu0 0.0
    %835 = vmatpush1.xpose.msra.mxu0 0.0
    %836 = vmatprep.subr.mxu0 0.0
    %837 = vmatpush1.xpose.msra.mxu0 0.0
    %838 = vmatprep.mubr.f32.mxu0 0.0
    %839 = vmatmul.mubr.f32.gmra.mrb[0].mxu0 %v724
    %v840 = vpop.f32.mrb[0].mxu0
    %v841 = vadd.f32 %v722, %v840
    %v842 = vpop.f32.mrb[0].mxu0
    %843 = vdwg.mxu0
    %844 = vst [vmem:[#allocation3] sm:$0x1] %v841
    // Predicated region
    $region38: #{tpu_custom_call.1} parent=1 // pred_check
      _
    $region39: #{tpu_custom_call.1} parent=1 // pred_check_branch
      %846 = sbr.rel (0) target = $region41
    $region40: #{tpu_custom_call.1} parent=1 // pred_region
      %s848 = ssub.s32 16, 16
      %849 = vsyncadd [#allocation4], %s848
      %s851 = sshll.u32 [#allocation3], 4
      %s852 = int_to_ptr.vmem [resolvable:$true] %s851
      %854 = dma.vmem_to_hbm [thread:$0]  %s852, 16, %s9, [#allocation4]
    $region41: #{tpu_custom_call.1} parent=1 // pred_fallthru
      _
    // Predicated region
    $region42: #{tpu_custom_call.1} parent=1 // pred_check
      _
    $region43: #{tpu_custom_call.1} parent=1 // pred_check_branch
      %856 = sbr.rel (0) target = $region45
    $region44: #{tpu_custom_call.1} parent=1 // pred_region
      %857 = dma.done [#allocation4], 16
    $region45: #{tpu_custom_call.1} parent=1 // pred_fallthru
      _
    %858 = vsyncpa [#allocation4], 1

</llo_original>
